<compile_context>
chip_gen: v5e
topology: v5e:2x2
jax: 0.10.0
libtpu: 0.0.40
codegen_flags: <defaults>
</compile_context>

<pallas_src>
import functools

import jax
import jax.numpy as jnp
from jax.experimental import pallas as pl
from jax.experimental.pallas import tpu as pltpu


def _round_up(x, m):
    return ((x + m - 1) // m) * m


def _default_kmat_dtype():
    """bf16 slab on chips with bf16 VPU/EUP (v6e, v7x); f32 elsewhere (v5e and older)."""
    try:
        kind = jax.devices()[0].device_kind.lower()
    except Exception:
        return jnp.float32
    if any(tag in kind for tag in ("v6", "v7", "7x")):
        return jnp.bfloat16
    return jnp.float32


def _vmem_capacity_bytes():
    try:
        return int(pltpu.get_tpu_info().vmem_capacity_bytes)
    except Exception:
        return 64 * 2**20          # conservative (v7x per-TC) floor


def _pairwise_kernel(neg_inv_2sig2, kmat_dtype,
                     mask_lhs_ref, mask_rhs_ref, pred_col_ref, pred_row_ref, targ_row_ref,
                     out_ref,
                     acc_mmd_ref, acc_cnt_ref, acc_sp_ref, acc_sse_ref):
    i = pl.program_id(0)          # row-block index ("parallel")
    j = pl.program_id(1)          # column-block index ("arbitrary" reduction axis)
    nb_j = pl.num_programs(1)

    # (Re)initialize every accumulator at the start of each row block's column sweep.
    # Re-zeroing the column-only stats for i > 0 is harmless (they are only accumulated
    # on i == 0 and have already been written out) and guarantees no uninitialized reads
    # on whichever core does not own row block 0 under megacore sharding.
    @pl.when(j == 0)
    def _init():
        acc_mmd_ref[...] = jnp.zeros_like(acc_mmd_ref)
        acc_cnt_ref[...] = jnp.zeros_like(acc_cnt_ref)
        acc_sp_ref[...] = jnp.zeros_like(acc_sp_ref)
        acc_sse_ref[...] = jnp.zeros_like(acc_sse_ref)

    mlhs = mask_lhs_ref[...]                        # [8, Tm]  rows: (m0, m0, m1, 0, ...)
    mrhs = mask_rhs_ref[...]                        # [8, Tk]  rows: (m0, m1, m1, 0, ...)
    pred_c = pred_col_ref[...].astype(kmat_dtype)   # [Tm, 1]
    pred_r = pred_row_ref[...].astype(kmat_dtype)   # [1, Tk]

    # ---- RBF kernel block [Tm, Tk]: bf16 VPU/EUP path on v6e/v7x, f32 on v5e.
    #      1/(2 sigma^2) is a hoisted Python constant (weak-typed -> stays kmat_dtype).
    d = pred_c - pred_r
    kmat = jnp.exp(d * d * neg_inv_2sig2)           # [Tm, Tk], kmat_dtype

    # ---- stacked-mask MXU pass: rows of kv are (m0@K, m0@K, m1@K) for this block.
    kv = jnp.dot(mlhs.astype(kmat_dtype), kmat,
                 preferred_element_type=jnp.float32)            # [8, Tk], f32
    # rows of kv * mrhs: (v0*m0, v0*m1, v1*m1) -> a00 / a01 / a11 partial sums (f32 accum)
    acc_mmd_ref[...] += jnp.sum(kv * mrhs, axis=-1, keepdims=True)   # [8, 1]

    # ---- column-only O(N) statistics: exactly once per column block (row-block 0 only)
    @pl.when(i == 0)
    def _stats():
        pred_f = pred_row_ref[...]                  # f32 views for the stats path
        targ_f = targ_row_ref[...]
        acc_cnt_ref[...] += jnp.sum(mrhs, axis=-1, keepdims=True)          # n0, n1, n1
        acc_sp_ref[...] += jnp.sum(mrhs * pred_f, axis=-1, keepdims=True)  # sp0, sp1, sp1
        diff = pred_f - targ_f                       # padded lanes are 0 - 0
        acc_sse_ref[...] += jnp.sum(diff * diff, axis=-1, keepdims=True)   # (1, 1)

    # ---- finalize this row block: write one lane-dense (8, 128) band (data on sublane 0)
    @pl.when(j == nb_j - 1)
    def _finalize():
        lane = jax.lax.broadcasted_iota(jnp.int32, (1, 128), 1)
        sub = jax.lax.broadcasted_iota(jnp.int32, (8, 128), 0)
        # For i > 0 the stats accumulators are exactly zero (reset at j == 0, never
        # updated), so the wrapper can simply sum all output rows.
        row = (jnp.where(lane == 0, acc_mmd_ref[0:1, :], 0.0)    # a00 partial
               + jnp.where(lane == 1, acc_mmd_ref[1:2, :], 0.0)  # a01 partial
               + jnp.where(lane == 2, acc_mmd_ref[2:3, :], 0.0)  # a11 partial
               + jnp.where(lane == 3, acc_sse_ref[0:1, :], 0.0)  # base-loss SSE
               + jnp.where(lane == 4, acc_cnt_ref[0:1, :], 0.0)  # n0
               + jnp.where(lane == 5, acc_cnt_ref[1:2, :], 0.0)  # n1
               + jnp.where(lane == 6, acc_sp_ref[0:1, :], 0.0)   # sum(m0 * pred)
               + jnp.where(lane == 7, acc_sp_ref[1:2, :], 0.0))  # sum(m1 * pred)
        out_ref[...] = jnp.where(sub == 0, row, 0.0)


def fairness_loss(feature, pred, target, group, *,
                  base_loss_weight=1.0, l2_loss_weight=0.1,
                  mmd_loss_weight=0.1, wd_loss_weight=0.1, sigma=1.0,
                  block_m=1024, block_k=1024, kmat_dtype=None):
    """FairnessLoss forward. kmat_dtype=None auto-selects bf16 on v6e/v7x, f32 on v5e."""
    N, D = feature.shape
    f32 = jnp.float32
    if kmat_dtype is None:
        kmat_dtype = _default_kmat_dtype()

    # --- 2-D tile sizes (multiples of 128), padded lengths per axis ---
    tm = _round_up(min(int(block_m), _round_up(N, 128)), 128)
    tk = _round_up(min(int(block_k), _round_up(N, 128)), 128)
    np_m = _round_up(N, tm)
    np_k = _round_up(N, tk)
    nb_i = np_m // tm
    nb_j = np_k // tk

    pred = pred.reshape(-1).astype(f32)
    target = target.reshape(-1).astype(f32)
    m1 = group.reshape(-1).astype(f32)
    m0 = 1.0 - m1

    def pad_to(x, length):
        return jnp.pad(x, (0, length - N)) if length > N else x

    # O(N) padded operands only (feature is never padded / copied).
    pred_col = pad_to(pred, np_m).reshape(np_m, 1)
    pred_row = pad_to(pred, np_k).reshape(1, np_k)
    targ_row = pad_to(target, np_k).reshape(1, np_k)

    zc = jnp.zeros((np_m,), f32)
    zr = jnp.zeros((np_k,), f32)
    m0c, m1c = pad_to(m0, np_m), pad_to(m1, np_m)
    m0r, m1r = pad_to(m0, np_k), pad_to(m1, np_k)
    # NOTE: rows 0-2 carry the duplicated stack (marginal cost; M=8 is the MXU minimum).
    mask_lhs = jnp.stack([m0c, m0c, m1c, zc, zc, zc, zc, zc], axis=0)   # [8, np_m]
    mask_rhs = jnp.stack([m0r, m1r, m1r, zr, zr, zr, zr, zr], axis=0)   # [8, np_k]

    # --- VMEM budget: generation-aware cap (stays below physical VMEM on v7x) ---
    itemsize = jnp.dtype(kmat_dtype).itemsize
    slab_bytes = 3 * tm * tk * itemsize + 8 * tk * 4           # d, d^2*c, kmat, kv
    io_bytes = 2 * 4 * (8 * tm + 128 * tm + 3 * 8 * tk) + 2 * 8 * 128 * 4
    est = slab_bytes + io_bytes + (2 << 20)
    vmem_cap = _vmem_capacity_bytes()
    vmem_limit = int(min(max(est, 32 << 20), max(vmem_cap - (8 << 20), 16 << 20)))

    kernel = functools.partial(
        _pairwise_kernel,
        -1.0 / (2.0 * float(sigma) * float(sigma)),
        kmat_dtype)

    partials = pl.pallas_call(
        kernel,
        out_shape=jax.ShapeDtypeStruct((nb_i * 8, 128), jnp.float32),
        grid_spec=pltpu.PrefetchScalarGridSpec(
            num_scalar_prefetch=0,
            grid=(nb_i, nb_j),
            in_specs=[
                pl.BlockSpec((8, tm), lambda i, j: (0, i)),    # mask_lhs row block
                pl.BlockSpec((8, tk), lambda i, j: (0, j)),    # mask_rhs column block
                pl.BlockSpec((tm, 1), lambda i, j: (i, 0)),    # pred column slice
                pl.BlockSpec((1, tk), lambda i, j: (0, j)),    # pred row slice
                pl.BlockSpec((1, tk), lambda i, j: (0, j)),    # target row slice
            ],
            out_specs=pl.BlockSpec((8, 128), lambda i, j: (i, 0)),
            scratch_shapes=[
                pltpu.VMEM((8, 1), jnp.float32),   # a00 / a01 / a11 partials
                pltpu.VMEM((8, 1), jnp.float32),   # group counts n0 / n1
                pltpu.VMEM((8, 1), jnp.float32),   # group-wise prediction sums
                pltpu.VMEM((1, 1), jnp.float32),   # base-loss sum of squared errors
            ]),
        compiler_params=pltpu.CompilerParams(
            dimension_semantics=("parallel", "arbitrary"),     # megacore on v7x
            vmem_limit_bytes=vmem_limit),
    )(mask_lhs, mask_rhs, pred_col, pred_row, targ_row)

    # --- tiny O(nb_i) epilogue: combine per-row-block partials ---
    row = jnp.sum(partials, axis=0)                 # (128,)
    a00, a01, a11 = row[0], row[1], row[2]
    sse, n0, n1, sp0, sp1 = row[3], row[4], row[5], row[6], row[7]
    n0 = jnp.maximum(n0, 1.0)
    n1 = jnp.maximum(n1, 1.0)

    base = sse / float(N)
    mmd = a00 / (n0 * n0) + a11 / (n1 * n1) - 2.0 * a01 / (n0 * n1)
    # TODO(synk): exact 1-D Wasserstein needs a sort; first-moment approximation kept.
    wd = jnp.abs(sp0 / n0 - sp1 / n1)

    # BinaryL2Loss: O(N*D) mem-bound group-mean matvec, fused by XLA. Kept out of the
    # pairwise kernel so feature streams HBM exactly once and the row axis stays parallel.
    feat = feature.astype(f32)
    mu = (m0 @ feat) / n0 - (m1 @ feat) / n1
    l2 = jnp.sum(mu * mu)

    total = (base_loss_weight * base + l2_loss_weight * l2
             + mmd_loss_weight * mmd + wd_loss_weight * wd)
    return {"total_loss": total, "base_loss": base, "l2_loss": l2,
            "mmd_loss": mmd, "wd_loss": wd}


def _reference(feature, pred, target, group, *, base_loss_weight, l2_loss_weight,
               mmd_loss_weight, wd_loss_weight, sigma):
    feature = feature.astype(jnp.float32)
    pred = pred.astype(jnp.float32)
    target = target.astype(jnp.float32)
    m1 = group.astype(jnp.float32)
    m0 = 1.0 - m1
    n0 = jnp.maximum(jnp.sum(m0), 1.0)
    n1 = jnp.maximum(jnp.sum(m1), 1.0)

    base = jnp.mean((pred - target) ** 2)

    mu0 = (m0[:, None] * feature).sum(0) / n0
    mu1 = (m1[:, None] * feature).sum(0) / n1
    l2 = jnp.sum((mu0 - mu1) ** 2)

    d2 = (pred[:, None] - pred[None, :]) ** 2
    K = jnp.exp(-d2 / (2.0 * sigma * sigma))
    a00 = m0 @ K @ m0
    a11 = m1 @ K @ m1
    a01 = m0 @ K @ m1
    mmd = a00 / (n0 * n0) + a11 / (n1 * n1) - 2.0 * a01 / (n0 * n1)

    wd = jnp.abs(jnp.sum(m0 * pred) / n0 - jnp.sum(m1 * pred) / n1)

    total = (base_loss_weight * base + l2_loss_weight * l2
             + mmd_loss_weight * mmd + wd_loss_weight * wd)
    return {"total_loss": total, "base_loss": base, "l2_loss": l2,
            "mmd_loss": mmd, "wd_loss": wd}


if __name__ == "__main__":
    N, D = 200, 32
    key = jax.random.PRNGKey(0)
    k1, k2, k3, k4 = jax.random.split(key, 4)

    feature = jax.random.normal(k1, (N, D), dtype=jnp.float32)
    pred = jax.nn.sigmoid(jax.random.normal(k2, (N,), dtype=jnp.float32))
    target = jax.random.bernoulli(k3, 0.5, (N,)).astype(jnp.float32)
    group = jax.random.bernoulli(k4, 0.5, (N,)).astype(jnp.int32)
    group = group.at[0].set(0).at[1].set(1)   # make sure both groups are present

    weights = dict(base_loss_weight=1.0, l2_loss_weight=0.2,
                   mmd_loss_weight=0.3, wd_loss_weight=0.4, sigma=1.0)
    names = ("total_loss", "base_loss", "l2_loss", "mmd_loss", "wd_loss")

    ref = _reference(feature, pred, target, group, **weights)

    # Exact path: f32 slab + small blocks so the 2-D grid, padding tail and the
    # row-block-0 gating are all exercised (grid = 2 x 2, pad = 56).
    out = fairness_loss(feature, pred, target, group,
                        block_m=128, block_k=128, kmat_dtype=jnp.float32, **weights)
    out = jax.tree_util.tree_map(jax.block_until_ready, out)
    for name in names:
        assert jnp.allclose(out[name], ref[name], rtol=1e-4, atol=2e-5), (
            name, out[name], ref[name])

    # Default path: auto block sizes + bf16 slab on v6e/v7x (f32 on v5e); looser
    # tolerance accounts for the bf16 kernel-matrix entries (accumulation stays f32).
    out_auto = fairness_loss(feature, pred, target, group, **weights)
    out_auto = jax.tree_util.tree_map(jax.block_until_ready, out_auto)
    for name in names:
        assert bool(jnp.isfinite(out_auto[name])), (name, out_auto[name])
        assert jnp.allclose(out_auto[name], ref[name], rtol=1e-1, atol=1e-1), (
            name, out_auto[name], ref[name])

    print("KERNEL_OK")
</pallas_src>

<mosaic_0001>
module attributes {stable_mosaic.version = 11 : i64} {
  func.func @_pairwise_kernel(%arg0: i32, %arg1: i32, %arg2: memref<8x128xf32, #tpu.memory_space<vmem>>, %arg3: memref<8x128xf32, #tpu.memory_space<vmem>>, %arg4: memref<128x1xf32, #tpu.memory_space<vmem>>, %arg5: memref<1x128xf32, #tpu.memory_space<vmem>>, %arg6: memref<1x128xf32, #tpu.memory_space<vmem>>, %arg7: memref<8x128xf32, #tpu.memory_space<vmem>>, %arg8: memref<8x1xf32, #tpu.memory_space<vmem>>, %arg9: memref<8x1xf32, #tpu.memory_space<vmem>>, %arg10: memref<8x1xf32, #tpu.memory_space<vmem>>, %arg11: memref<1x1xf32, #tpu.memory_space<vmem>>) attributes {dimension_semantics = [#tpu.dimension_semantics<parallel>, #tpu.dimension_semantics<arbitrary>], iteration_bounds = array<i64: 2, 2>, scalar_prefetch = 0 : i64, scratch_operands = 4 : i64, tpu.core_type = #tpu.core_type<tc>, window_params = [{transform_indices = @transform_0, window_bounds = array<i64: 8, 128>}, {transform_indices = @transform_1, window_bounds = array<i64: 8, 128>}, {transform_indices = @transform_2, window_bounds = array<i64: 128, 1>}, {transform_indices = @transform_3, window_bounds = array<i64: 1, 128>}, {transform_indices = @transform_4, window_bounds = array<i64: 1, 128>}, {transform_indices = @transform_5, window_bounds = array<i64: 8, 128>}]} {
    %c0_i32 = arith.constant 0 : i32
    %0 = arith.cmpi eq, %arg1, %c0_i32 : i32
    %1 = arith.extui %0 : i1 to i32
    %c0_i32_0 = arith.constant 0 : i32
    %2 = arith.cmpi ne, %1, %c0_i32_0 : i32
    scf.if %2 {
      %cst_17 = arith.constant 0.000000e+00 : f32
      %27 = vector.broadcast %cst_17 : f32 to vector<8x1xf32>
      %c0_18 = arith.constant 0 : index
      %c0_19 = arith.constant 0 : index
      %28 = vector.load %arg8[%c0_18, %c0_19] : memref<8x1xf32, #tpu.memory_space<vmem>>, vector<8x1xf32>
      tpu.vector_store %arg8[%c0_18, %c0_19], %27 {strides = array<i32>} : memref<8x1xf32, #tpu.memory_space<vmem>>, vector<8x1xf32>,
      %cst_20 = arith.constant 0.000000e+00 : f32
      %29 = vector.broadcast %cst_20 : f32 to vector<8x1xf32>
      %c0_21 = arith.constant 0 : index
      %c0_22 = arith.constant 0 : index
      %30 = vector.load %arg9[%c0_21, %c0_22] : memref<8x1xf32, #tpu.memory_space<vmem>>, vector<8x1xf32>
      tpu.vector_store %arg9[%c0_21, %c0_22], %29 {strides = array<i32>} : memref<8x1xf32, #tpu.memory_space<vmem>>, vector<8x1xf32>,
      %cst_23 = arith.constant 0.000000e+00 : f32
      %31 = vector.broadcast %cst_23 : f32 to vector<8x1xf32>
      %c0_24 = arith.constant 0 : index
      %c0_25 = arith.constant 0 : index
      %32 = vector.load %arg10[%c0_24, %c0_25] : memref<8x1xf32, #tpu.memory_space<vmem>>, vector<8x1xf32>
      tpu.vector_store %arg10[%c0_24, %c0_25], %31 {strides = array<i32>} : memref<8x1xf32, #tpu.memory_space<vmem>>, vector<8x1xf32>,
      %cst_26 = arith.constant 0.000000e+00 : f32
      %33 = vector.broadcast %cst_26 : f32 to vector<1x1xf32>
      %c0_27 = arith.constant 0 : index
      %c0_28 = arith.constant 0 : index
      %34 = vector.load %arg11[%c0_27, %c0_28] : memref<1x1xf32, #tpu.memory_space<vmem>>, vector<1x1xf32>
      tpu.vector_store %arg11[%c0_27, %c0_28], %33 {strides = array<i32>} : memref<1x1xf32, #tpu.memory_space<vmem>>, vector<1x1xf32>,
    } else {
    }
    %c0 = arith.constant 0 : index
    %c0_1 = arith.constant 0 : index
    %3 = vector.load %arg2[%c0, %c0_1] : memref<8x128xf32, #tpu.memory_space<vmem>>, vector<8x128xf32>
    %c0_2 = arith.constant 0 : index
    %c0_3 = arith.constant 0 : index
    %4 = vector.load %arg3[%c0_2, %c0_3] : memref<8x128xf32, #tpu.memory_space<vmem>>, vector<8x128xf32>
    %c0_4 = arith.constant 0 : index
    %c0_5 = arith.constant 0 : index
    %5 = vector.load %arg4[%c0_4, %c0_5] : memref<128x1xf32, #tpu.memory_space<vmem>>, vector<128x1xf32>
    %c0_6 = arith.constant 0 : index
    %c0_7 = arith.constant 0 : index
    %6 = vector.load %arg5[%c0_6, %c0_7] : memref<1x128xf32, #tpu.memory_space<vmem>>, vector<1x128xf32>
    %7 = vector.broadcast %5 : vector<128x1xf32> to vector<128x128xf32>
    %8 = vector.broadcast %6 : vector<1x128xf32> to vector<128x128xf32>
    %9 = arith.subf %7, %8 : vector<128x128xf32>
    %10 = arith.mulf %9, %9 : vector<128x128xf32>
    %cst = arith.constant -5.000000e-01 : f32
    %11 = vector.broadcast %cst : f32 to vector<128x128xf32>
    %12 = arith.mulf %10, %11 : vector<128x128xf32>
    %13 = math.exp %12 : vector<128x128xf32>
    %cst_8 = arith.constant dense<0.000000e+00> : vector<8x128xf32>
    %14 = tpu.matmul %3, %13, %cst_8 {dimension_numbers = #tpu.dot_dimension_numbers<[1], [0], [0], [1], [0, 0, 1, 1], [], []>} : vector<8x128xf32>, vector<128x128xf32>, vector<8x128xf32> -> vector<8x128xf32>
    %c0_9 = arith.constant 0 : index
    %c0_10 = arith.constant 0 : index
    %15 = vector.load %arg8[%c0_9, %c0_10] : memref<8x1xf32, #tpu.memory_space<vmem>>, vector<8x1xf32>
    %16 = arith.mulf %14, %4 : vector<8x128xf32>
    %cst_11 = arith.constant dense<0.000000e+00> : vector<8xf32>
    %17 = vector.multi_reduction <add>, %16, %cst_11 [1] : vector<8x128xf32> to vector<8xf32>
    %18 = vector.shape_cast %17 : vector<8xf32> to vector<8x1xf32>
    %19 = arith.addf %15, %18 : vector<8x1xf32>
    %c0_12 = arith.constant 0 : index
    %c0_13 = arith.constant 0 : index
    %20 = vector.load %arg8[%c0_12, %c0_13] : memref<8x1xf32, #tpu.memory_space<vmem>>, vector<8x1xf32>
    tpu.vector_store %arg8[%c0_12, %c0_13], %19 {strides = array<i32>} : memref<8x1xf32, #tpu.memory_space<vmem>>, vector<8x1xf32>,
    %c0_i32_14 = arith.constant 0 : i32
    %21 = arith.cmpi eq, %arg0, %c0_i32_14 : i32
    %22 = arith.extui %21 : i1 to i32
    %c0_i32_15 = arith.constant 0 : i32
    %23 = arith.cmpi ne, %22, %c0_i32_15 : i32
    scf.if %23 {
      %c0_17 = arith.constant 0 : index
      %c0_18 = arith.constant 0 : index
      %27 = vector.load %arg5[%c0_17, %c0_18] : memref<1x128xf32, #tpu.memory_space<vmem>>, vector<1x128xf32>
      %c0_19 = arith.constant 0 : index
      %c0_20 = arith.constant 0 : index
      %28 = vector.load %arg6[%c0_19, %c0_20] : memref<1x128xf32, #tpu.memory_space<vmem>>, vector<1x128xf32>
      %c0_21 = arith.constant 0 : index
      %c0_22 = arith.constant 0 : index
      %29 = vector.load %arg9[%c0_21, %c0_22] : memref<8x1xf32, #tpu.memory_space<vmem>>, vector<8x1xf32>
      %cst_23 = arith.constant dense<0.000000e+00> : vector<8xf32>
      %30 = vector.multi_reduction <add>, %4, %cst_23 [1] : vector<8x128xf32> to vector<8xf32>
      %31 = vector.shape_cast %30 : vector<8xf32> to vector<8x1xf32>
      %32 = arith.addf %29, %31 : vector<8x1xf32>
      %c0_24 = arith.constant 0 : index
      %c0_25 = arith.constant 0 : index
      %33 = vector.load %arg9[%c0_24, %c0_25] : memref<8x1xf32, #tpu.memory_space<vmem>>, vector<8x1xf32>
      tpu.vector_store %arg9[%c0_24, %c0_25], %32 {strides = array<i32>} : memref<8x1xf32, #tpu.memory_space<vmem>>, vector<8x1xf32>,
      %c0_26 = arith.constant 0 : index
      %c0_27 = arith.constant 0 : index
      %34 = vector.load %arg10[%c0_26, %c0_27] : memref<8x1xf32, #tpu.memory_space<vmem>>, vector<8x1xf32>
      %35 = vector.broadcast %27 : vector<1x128xf32> to vector<8x128xf32>
      %36 = arith.mulf %4, %35 : vector<8x128xf32>
      %cst_28 = arith.constant dense<0.000000e+00> : vector<8xf32>
      %37 = vector.multi_reduction <add>, %36, %cst_28 [1] : vector<8x128xf32> to vector<8xf32>
      %38 = vector.shape_cast %37 : vector<8xf32> to vector<8x1xf32>
      %39 = arith.addf %34, %38 : vector<8x1xf32>
      %c0_29 = arith.constant 0 : index
      %c0_30 = arith.constant 0 : index
      %40 = vector.load %arg10[%c0_29, %c0_30] : memref<8x1xf32, #tpu.memory_space<vmem>>, vector<8x1xf32>
      tpu.vector_store %arg10[%c0_29, %c0_30], %39 {strides = array<i32>} : memref<8x1xf32, #tpu.memory_space<vmem>>, vector<8x1xf32>,
      %41 = arith.subf %27, %28 : vector<1x128xf32>
      %c0_31 = arith.constant 0 : index
      %c0_32 = arith.constant 0 : index
      %42 = vector.load %arg11[%c0_31, %c0_32] : memref<1x1xf32, #tpu.memory_space<vmem>>, vector<1x1xf32>
      %43 = arith.mulf %41, %41 : vector<1x128xf32>
      %cst_33 = arith.constant dense<0.000000e+00> : vector<1xf32>
      %44 = vector.multi_reduction <add>, %43, %cst_33 [1] : vector<1x128xf32> to vector<1xf32>
      %45 = vector.shape_cast %44 : vector<1xf32> to vector<1x1xf32>
      %46 = arith.addf %42, %45 : vector<1x1xf32>
      %c0_34 = arith.constant 0 : index
      %c0_35 = arith.constant 0 : index
      %47 = vector.load %arg11[%c0_34, %c0_35] : memref<1x1xf32, #tpu.memory_space<vmem>>, vector<1x1xf32>
      tpu.vector_store %arg11[%c0_34, %c0_35], %46 {strides = array<i32>} : memref<1x1xf32, #tpu.memory_space<vmem>>, vector<1x1xf32>,
    } else {
    }
    %c1_i32 = arith.constant 1 : i32
    %24 = arith.cmpi eq, %arg1, %c1_i32 : i32
    %25 = arith.extui %24 : i1 to i32
    %c0_i32_16 = arith.constant 0 : i32
    %26 = arith.cmpi ne, %25, %c0_i32_16 : i32
    scf.if %26 {
      %27 = tpu.iota {dimensions = array<i32: 1>} : vector<1x128xi32>
      %28 = tpu.iota {dimensions = array<i32: 0>} : vector<8x128xi32>
      %c0_i32_17 = arith.constant 0 : i32
      %29 = vector.broadcast %c0_i32_17 : i32 to vector<1x128xi32>
      %30 = arith.cmpi eq, %27, %29 : vector<1x128xi32>
      %c0_18 = arith.constant 0 : index
      %c0_19 = arith.constant 0 : index
      %31 = vector.load %arg8[%c0_18, %c0_19] : memref<8x1xf32, #tpu.memory_space<vmem>>, vector<1x1xf32>
      %cst_20 = arith.constant 0.000000e+00 : f32
      %32 = vector.shape_cast %31 : vector<1x1xf32> to vector<1x1xf32>
      %33 = vector.broadcast %32 : vector<1x1xf32> to vector<1x128xf32>
      %34 = vector.broadcast %cst_20 : f32 to vector<1x128xf32>
      %35 = arith.select %30, %33, %34 : vector<1x128xi1>, vector<1x128xf32>
      %c1_i32_21 = arith.constant 1 : i32
      %36 = vector.broadcast %c1_i32_21 : i32 to vector<1x128xi32>
      %37 = arith.cmpi eq, %27, %36 : vector<1x128xi32>
      %c1 = arith.constant 1 : index
      %c0_22 = arith.constant 0 : index
      %38 = vector.load %arg8[%c1, %c0_22] : memref<8x1xf32, #tpu.memory_space<vmem>>, vector<1x1xf32>
      %cst_23 = arith.constant 0.000000e+00 : f32
      %39 = vector.shape_cast %38 : vector<1x1xf32> to vector<1x1xf32>
      %40 = vector.broadcast %39 : vector<1x1xf32> to vector<1x128xf32>
      %41 = vector.broadcast %cst_23 : f32 to vector<1x128xf32>
      %42 = arith.select %37, %40, %41 : vector<1x128xi1>, vector<1x128xf32>
      %43 = arith.addf %35, %42 : vector<1x128xf32>
      %c2_i32 = arith.constant 2 : i32
      %44 = vector.broadcast %c2_i32 : i32 to vector<1x128xi32>
      %45 = arith.cmpi eq, %27, %44 : vector<1x128xi32>
      %c2 = arith.constant 2 : index
      %c0_24 = arith.constant 0 : index
      %46 = vector.load %arg8[%c2, %c0_24] : memref<8x1xf32, #tpu.memory_space<vmem>>, vector<1x1xf32>
      %cst_25 = arith.constant 0.000000e+00 : f32
      %47 = vector.shape_cast %46 : vector<1x1xf32> to vector<1x1xf32>
      %48 = vector.broadcast %47 : vector<1x1xf32> to vector<1x128xf32>
      %49 = vector.broadcast %cst_25 : f32 to vector<1x128xf32>
      %50 = arith.select %45, %48, %49 : vector<1x128xi1>, vector<1x128xf32>
      %51 = arith.addf %43, %50 : vector<1x128xf32>
      %c3_i32 = arith.constant 3 : i32
      %52 = vector.broadcast %c3_i32 : i32 to vector<1x128xi32>
      %53 = arith.cmpi eq, %27, %52 : vector<1x128xi32>
      %c0_26 = arith.constant 0 : index
      %c0_27 = arith.constant 0 : index
      %54 = vector.load %arg11[%c0_26, %c0_27] : memref<1x1xf32, #tpu.memory_space<vmem>>, vector<1x1xf32>
      %cst_28 = arith.constant 0.000000e+00 : f32
      %55 = vector.shape_cast %54 : vector<1x1xf32> to vector<1x1xf32>
      %56 = vector.broadcast %55 : vector<1x1xf32> to vector<1x128xf32>
      %57 = vector.broadcast %cst_28 : f32 to vector<1x128xf32>
      %58 = arith.select %53, %56, %57 : vector<1x128xi1>, vector<1x128xf32>
      %59 = arith.addf %51, %58 : vector<1x128xf32>
      %c4_i32 = arith.constant 4 : i32
      %60 = vector.broadcast %c4_i32 : i32 to vector<1x128xi32>
      %61 = arith.cmpi eq, %27, %60 : vector<1x128xi32>
      %c0_29 = arith.constant 0 : index
      %c0_30 = arith.constant 0 : index
      %62 = vector.load %arg9[%c0_29, %c0_30] : memref<8x1xf32, #tpu.memory_space<vmem>>, vector<1x1xf32>
      %cst_31 = arith.constant 0.000000e+00 : f32
      %63 = vector.shape_cast %62 : vector<1x1xf32> to vector<1x1xf32>
      %64 = vector.broadcast %63 : vector<1x1xf32> to vector<1x128xf32>
      %65 = vector.broadcast %cst_31 : f32 to vector<1x128xf32>
      %66 = arith.select %61, %64, %65 : vector<1x128xi1>, vector<1x128xf32>
      %67 = arith.addf %59, %66 : vector<1x128xf32>
      %c5_i32 = arith.constant 5 : i32
      %68 = vector.broadcast %c5_i32 : i32 to vector<1x128xi32>
      %69 = arith.cmpi eq, %27, %68 : vector<1x128xi32>
      %c1_32 = arith.constant 1 : index
      %c0_33 = arith.constant 0 : index
      %70 = vector.load %arg9[%c1_32, %c0_33] : memref<8x1xf32, #tpu.memory_space<vmem>>, vector<1x1xf32>
      %cst_34 = arith.constant 0.000000e+00 : f32
      %71 = vector.shape_cast %70 : vector<1x1xf32> to vector<1x1xf32>
      %72 = vector.broadcast %71 : vector<1x1xf32> to vector<1x128xf32>
      %73 = vector.broadcast %cst_34 : f32 to vector<1x128xf32>
      %74 = arith.select %69, %72, %73 : vector<1x128xi1>, vector<1x128xf32>
      %75 = arith.addf %67, %74 : vector<1x128xf32>
      %c6_i32 = arith.constant 6 : i32
      %76 = vector.broadcast %c6_i32 : i32 to vector<1x128xi32>
      %77 = arith.cmpi eq, %27, %76 : vector<1x128xi32>
      %c0_35 = arith.constant 0 : index
      %c0_36 = arith.constant 0 : index
      %78 = vector.load %arg10[%c0_35, %c0_36] : memref<8x1xf32, #tpu.memory_space<vmem>>, vector<1x1xf32>
      %cst_37 = arith.constant 0.000000e+00 : f32
      %79 = vector.shape_cast %78 : vector<1x1xf32> to vector<1x1xf32>
      %80 = vector.broadcast %79 : vector<1x1xf32> to vector<1x128xf32>
      %81 = vector.broadcast %cst_37 : f32 to vector<1x128xf32>
      %82 = arith.select %77, %80, %81 : vector<1x128xi1>, vector<1x128xf32>
      %83 = arith.addf %75, %82 : vector<1x128xf32>
      %c7_i32 = arith.constant 7 : i32
      %84 = vector.broadcast %c7_i32 : i32 to vector<1x128xi32>
      %85 = arith.cmpi eq, %27, %84 : vector<1x128xi32>
      %c1_38 = arith.constant 1 : index
      %c0_39 = arith.constant 0 : index
      %86 = vector.load %arg10[%c1_38, %c0_39] : memref<8x1xf32, #tpu.memory_space<vmem>>, vector<1x1xf32>
      %cst_40 = arith.constant 0.000000e+00 : f32
      %87 = vector.shape_cast %86 : vector<1x1xf32> to vector<1x1xf32>
      %88 = vector.broadcast %87 : vector<1x1xf32> to vector<1x128xf32>
      %89 = vector.broadcast %cst_40 : f32 to vector<1x128xf32>
      %90 = arith.select %85, %88, %89 : vector<1x128xi1>, vector<1x128xf32>
      %91 = arith.addf %83, %90 : vector<1x128xf32>
      %c0_i32_41 = arith.constant 0 : i32
      %92 = vector.broadcast %c0_i32_41 : i32 to vector<8x128xi32>
      %93 = arith.cmpi eq, %28, %92 : vector<8x128xi32>
      %cst_42 = arith.constant 0.000000e+00 : f32
      %94 = vector.shape_cast %91 : vector<1x128xf32> to vector<1x128xf32>
      %95 = vector.broadcast %94 : vector<1x128xf32> to vector<8x128xf32>
      %96 = vector.broadcast %cst_42 : f32 to vector<8x128xf32>
      %97 = arith.select %93, %95, %96 : vector<8x128xi1>, vector<8x128xf32>
      %c0_43 = arith.constant 0 : index
      %c0_44 = arith.constant 0 : index
      %98 = vector.load %arg7[%c0_43, %c0_44] : memref<8x128xf32, #tpu.memory_space<vmem>>, vector<8x128xf32>
      tpu.vector_store %arg7[%c0_43, %c0_44], %97 {strides = array<i32>} : memref<8x128xf32, #tpu.memory_space<vmem>>, vector<8x128xf32>,
    } else {
    }
    return
  }
  func.func @transform_0(%arg0: i32, %arg1: i32) -> (i32, i32) {
    %c0_i32 = arith.constant 0 : i32
    %c0_i32_0 = arith.constant 0 : i32
    return %c0_i32, %arg0 : i32, i32
  }
  func.func @transform_1(%arg0: i32, %arg1: i32) -> (i32, i32) {
    %c0_i32 = arith.constant 0 : i32
    %c0_i32_0 = arith.constant 0 : i32
    return %c0_i32, %arg1 : i32, i32
  }
  func.func @transform_2(%arg0: i32, %arg1: i32) -> (i32, i32) {
    %c0_i32 = arith.constant 0 : i32
    %c0_i32_0 = arith.constant 0 : i32
    return %arg0, %c0_i32 : i32, i32
  }
  func.func @transform_3(%arg0: i32, %arg1: i32) -> (i32, i32) {
    %c0_i32 = arith.constant 0 : i32
    %c0_i32_0 = arith.constant 0 : i32
    return %c0_i32, %arg1 : i32, i32
  }
  func.func @transform_4(%arg0: i32, %arg1: i32) -> (i32, i32) {
    %c0_i32 = arith.constant 0 : i32
    %c0_i32_0 = arith.constant 0 : i32
    return %c0_i32, %arg1 : i32, i32
  }
  func.func @transform_5(%arg0: i32, %arg1: i32) -> (i32, i32) {
    %c0_i32 = arith.constant 0 : i32
    %c0_i32_0 = arith.constant 0 : i32
    return %arg0, %c0_i32 : i32, i32
  }
}

</mosaic_0001>

<llo_original>
// kernel: tpu_custom_call.1
$region0: #{tpu_custom_call.1}
  #allocation0 [shape = 'u32[]', space=smem, size = 0x4, offset = 0x4, fixed_abs, tag = 'smem constant byte address 0x4 - core index']
  #allocation1 [shape = 'u32[72,128]{1,0:T(1,128)}', space=vmem, size = 0x9000, scoped, tag = 'internal scratch']
  #allocation2 [shape = 'f32[8,1]{1,0:T(8,128)}', space=vmem, size = 0x1000, scoped, tag = 'scratch operand']
  #allocation3 [shape = 'f32[8,1]{1,0:T(8,128)}', space=vmem, size = 0x1000, scoped, tag = 'scratch operand']
  #allocation4 [shape = 'f32[8,1]{1,0:T(8,128)}', space=vmem, size = 0x1000, scoped, tag = 'scratch operand']
  #allocation5 [shape = 'f32[1,1]{1,0:T(1,128)}', space=vmem, size = 0x200, scoped, tag = 'scratch operand']
  %s0 = inlined_call_operand.vmem [shape: f32[8,256], index: 0, kind: input, shape index: {}]
  %s1 = inlined_call_operand.vmem [shape: f32[8,256], index: 1, kind: input, shape index: {}]
  %s2 = inlined_call_operand.vmem [shape: f32[256,1], index: 2, kind: input, shape index: {}]
  %s3 = inlined_call_operand.vmem [shape: f32[1,256], index: 3, kind: input, shape index: {}]
  %s4 = inlined_call_operand.vmem [shape: f32[1,256], index: 4, kind: input, shape index: {}]
  %s5 = inlined_call_operand.hbm [shape: f32[16,128], index: 5, kind: output, shape index: {}]
  %s6 = sld [smem:[#allocation0]]
  $region65: #{tpu_custom_call.1} parent=0
    _
  %s8 = ssub.s32 1, %s6
  %s9 = scalar_select 0, %s8, %s6
  $region1: #{tpu_custom_call.1} parent=0
    #allocation6 [shape = 'u8[8192]{0}', space=vmem, size = 0x2000, scoped, tag = 'output window, operand 0']
    #allocation7 [shape = 's32[2]{0}', space=sflag, size = 0x8, scoped, tag = 'scoped memory for tpu_custom_call.1']
    %10 = vsyncpa [#allocation7], 0
    %s11 = scalar_lea.sflag [#allocation7], 1
    %12 = vsyncpa %s11, 0
    loop: start=0, step=1, limit=6
    $region2: #{tpu_custom_call.1} parent=1 // loop_pre_header
      _
    $region3: #{tpu_custom_call.1} parent=1 // loop_header
      %s14 = sphi 0, %s18
      %p15 = scmp.ge.s32.totalorder %s14, 6
      %s21 = sphi 0, %s33
      %s22 = sphi 0, %s29
      %s23 = sphi 0, %s21
      %s24 = sphi 0, %s22
      %s25 = sphi 0, %s23
      %s26 = sphi 0, %s24
      %s36 = sphi 0, %s38
      %s39 = sphi 0, %s36
      %s40 = sphi 0, %s39
      %s56 = sphi 0, %s40
      %s62 = sphi 0, %s64
      %s65 = sphi 0, %s62
      %s66 = sphi 0, %s65
      %s82 = sphi 0, %s66
      %s88 = sphi 0, %s90
      %s91 = sphi 0, %s88
      %s92 = sphi 0, %s91
      %s108 = sphi 0, %s92
      %s114 = sphi 0, %s116
      %s117 = sphi 0, %s114
      %s118 = sphi 0, %s117
      %s134 = sphi 0, %s118
      %s140 = sphi 0, %s142
      %s143 = sphi 0, %s140
      %s144 = sphi 0, %s143
      %s160 = sphi 0, %s144
      %s166 = sphi 0, %s168
      %s169 = sphi 0, %s166
      %s170 = sphi 0, %s169
      %s186 = sphi 0, %s170
    $region4: #{tpu_custom_call.1} parent=1 // loop_header_branch
      %17 = sbr.rel (%p15) target = $region8
    $region5: #{tpu_custom_call.1} parent=1 // loop_body
      %s19 = ssub.s32 %s14, 1
      %s20 = ssub.s32 %s14, 2
      %s27 = sadd.s32 1, %s22
      %p28 = scmp.ge.s32.totalorder %s27, 2
      %s29 = scalar_select %p28, 0, %s27
      %s30 = sadd.s32 1, %s21
      %s31 = scalar_select %p28, %s30, %s21
      %p32 = scmp.ge.s32.totalorder %s31, 2
      %s33 = scalar_select %p32, 0, %s31
      %s34 = ssub.s32 %s21, %s33
      %p35 = scmp.eq.s32.totalorder %s34, 0
      %s37 = sadd.s32 %s36, 1
      %s38 = scalar_select %p35, %s36, %s37
      %p41 = pneg %p35
      %p42 = scmp.eq.s32.totalorder %s14, 3
      %p43 = por %p41, %p42
      %p44 = scmp.ne.s32.totalorder %s36, %s39
      %p45 = scmp.eq.s32.totalorder %s14, 0
      %p46 = por %p44, %p45
      %p47 = scmp.ne.s32.totalorder %s36, %s39
      %p48 = scmp.eq.s32.totalorder %s19, 3
      %p49 = por %p47, %p48
      %p50 = scmp.ne.s32.totalorder %s39, %s40
      %p51 = scmp.eq.s32.totalorder %s19, 0
      %p52 = por %p50, %p51
      %p53 = scmp.ne.s32.totalorder %s39, %s40
      %p54 = scmp.eq.s32.totalorder %s20, 3
      %p55 = por %p53, %p54
      %p57 = scmp.ne.s32.totalorder %s40, %s56
      %p58 = scmp.eq.s32.totalorder %s20, 0
      %p59 = por %p57, %p58
      %s60 = ssub.s32 %s22, %s29
      %p61 = scmp.eq.s32.totalorder %s60, 0
      %s63 = sadd.s32 %s62, 1
      %s64 = scalar_select %p61, %s62, %s63
      %p67 = pneg %p61
      %p68 = scmp.eq.s32.totalorder %s14, 3
      %p69 = por %p67, %p68
      %p70 = scmp.ne.s32.totalorder %s62, %s65
      %p71 = scmp.eq.s32.totalorder %s14, 0
      %p72 = por %p70, %p71
      %p73 = scmp.ne.s32.totalorder %s62, %s65
      %p74 = scmp.eq.s32.totalorder %s19, 3
      %p75 = por %p73, %p74
      %p76 = scmp.ne.s32.totalorder %s65, %s66
      %p77 = scmp.eq.s32.totalorder %s19, 0
      %p78 = por %p76, %p77
      %p79 = scmp.ne.s32.totalorder %s65, %s66
      %p80 = scmp.eq.s32.totalorder %s20, 3
      %p81 = por %p79, %p80
      %p83 = scmp.ne.s32.totalorder %s66, %s82
      %p84 = scmp.eq.s32.totalorder %s20, 0
      %p85 = por %p83, %p84
      %s86 = ssub.s32 %s21, %s33
      %p87 = scmp.eq.s32.totalorder %s86, 0
      %s89 = sadd.s32 %s88, 1
      %s90 = scalar_select %p87, %s88, %s89
      %p93 = pneg %p87
      %p94 = scmp.eq.s32.totalorder %s14, 3
      %p95 = por %p93, %p94
      %p96 = scmp.ne.s32.totalorder %s88, %s91
      %p97 = scmp.eq.s32.totalorder %s14, 0
      %p98 = por %p96, %p97
      %p99 = scmp.ne.s32.totalorder %s88, %s91
      %p100 = scmp.eq.s32.totalorder %s19, 3
      %p101 = por %p99, %p100
      %p102 = scmp.ne.s32.totalorder %s91, %s92
      %p103 = scmp.eq.s32.totalorder %s19, 0
      %p104 = por %p102, %p103
      %p105 = scmp.ne.s32.totalorder %s91, %s92
      %p106 = scmp.eq.s32.totalorder %s20, 3
      %p107 = por %p105, %p106
      %p109 = scmp.ne.s32.totalorder %s92, %s108
      %p110 = scmp.eq.s32.totalorder %s20, 0
      %p111 = por %p109, %p110
      %s112 = ssub.s32 %s22, %s29
      %p113 = scmp.eq.s32.totalorder %s112, 0
      %s115 = sadd.s32 %s114, 1
      %s116 = scalar_select %p113, %s114, %s115
      %p119 = pneg %p113
      %p120 = scmp.eq.s32.totalorder %s14, 3
      %p121 = por %p119, %p120
      %p122 = scmp.ne.s32.totalorder %s114, %s117
      %p123 = scmp.eq.s32.totalorder %s14, 0
      %p124 = por %p122, %p123
      %p125 = scmp.ne.s32.totalorder %s114, %s117
      %p126 = scmp.eq.s32.totalorder %s19, 3
      %p127 = por %p125, %p126
      %p128 = scmp.ne.s32.totalorder %s117, %s118
      %p129 = scmp.eq.s32.totalorder %s19, 0
      %p130 = por %p128, %p129
      %p131 = scmp.ne.s32.totalorder %s117, %s118
      %p132 = scmp.eq.s32.totalorder %s20, 3
      %p133 = por %p131, %p132
      %p135 = scmp.ne.s32.totalorder %s118, %s134
      %p136 = scmp.eq.s32.totalorder %s20, 0
      %p137 = por %p135, %p136
      %s138 = ssub.s32 %s22, %s29
      %p139 = scmp.eq.s32.totalorder %s138, 0
      %s141 = sadd.s32 %s140, 1
      %s142 = scalar_select %p139, %s140, %s141
      %p145 = pneg %p139
      %p146 = scmp.eq.s32.totalorder %s14, 3
      %p147 = por %p145, %p146
      %p148 = scmp.ne.s32.totalorder %s140, %s143
      %p149 = scmp.eq.s32.totalorder %s14, 0
      %p150 = por %p148, %p149
      %p151 = scmp.ne.s32.totalorder %s140, %s143
      %p152 = scmp.eq.s32.totalorder %s19, 3
      %p153 = por %p151, %p152
      %p154 = scmp.ne.s32.totalorder %s143, %s144
      %p155 = scmp.eq.s32.totalorder %s19, 0
      %p156 = por %p154, %p155
      %p157 = scmp.ne.s32.totalorder %s143, %s144
      %p158 = scmp.eq.s32.totalorder %s20, 3
      %p159 = por %p157, %p158
      %p161 = scmp.ne.s32.totalorder %s144, %s160
      %p162 = scmp.eq.s32.totalorder %s20, 0
      %p163 = por %p161, %p162
      %s164 = ssub.s32 %s21, %s33
      %p165 = scmp.eq.s32.totalorder %s164, 0
      %s167 = sadd.s32 %s166, 1
      %s168 = scalar_select %p165, %s166, %s167
      %p171 = pneg %p165
      %p172 = scmp.eq.s32.totalorder %s14, 3
      %p173 = por %p171, %p172
      %p174 = scmp.ne.s32.totalorder %s166, %s169
      %p175 = scmp.eq.s32.totalorder %s14, 0
      %p176 = por %p174, %p175
      %p177 = scmp.ne.s32.totalorder %s166, %s169
      %p178 = scmp.eq.s32.totalorder %s19, 3
      %p179 = por %p177, %p178
      %p180 = scmp.ne.s32.totalorder %s169, %s170
      %p181 = scmp.eq.s32.totalorder %s19, 0
      %p182 = por %p180, %p181
      %p183 = scmp.ne.s32.totalorder %s169, %s170
      %p184 = scmp.eq.s32.totalorder %s20, 3
      %p185 = por %p183, %p184
      %p187 = scmp.ne.s32.totalorder %s170, %s186
      %p188 = scmp.eq.s32.totalorder %s20, 0
      %p189 = por %p187, %p188
      %p190 = scmp.le.s32.totalorder 1, %s14
      %p191 = scmp.lt.s32.totalorder %s14, 5
      %p192 = pnand %p190, %p191
      %p193 = pneg %p192
      // Predicated region
      $region9: #{tpu_custom_call.1} parent=5 // pred_check
        _
      $region10: #{tpu_custom_call.1} parent=5 // pred_check_branch
        %195 = sbr.rel (%p192) target = $region12
      $region11: #{tpu_custom_call.1} parent=5 // pred_region
        %s196 = ssub.s32 %s14, 1
      $region12: #{tpu_custom_call.1} parent=5 // pred_fallthru
        _
      %p197 = scmp.lt.s32.totalorder %s14, 4
      // Predicated region
      $region13: #{tpu_custom_call.1} parent=5 // pred_check
        %p198 = pneg %p197
      $region14: #{tpu_custom_call.1} parent=5 // pred_check_branch
        %200 = sbr.rel (%p198) target = $region16
      $region15: #{tpu_custom_call.1} parent=5 // pred_region
        // Predicated region
        $region17: #{tpu_custom_call.1} parent=15 // pred_check
          %p201 = pneg %p46
        $region18: #{tpu_custom_call.1} parent=15 // pred_check_branch
          %203 = sbr.rel (%p201) target = $region20
        $region19: #{tpu_custom_call.1} parent=15 // pred_region
          %p204 = scmp.lt.s32.totalorder %s21, 1
          %s205 = scalar_select %p204, %s21, 1
          %s206 = smul.addr %s205, 8
          %s207 = scalar_lea.vmem %s0, %s206
        $region20: #{tpu_custom_call.1} parent=15 // pred_fallthru
          _
        // Predicated region
        $region21: #{tpu_custom_call.1} parent=15 // pred_check
          %p208 = pneg %p72
        $region22: #{tpu_custom_call.1} parent=15 // pred_check_branch
          %210 = sbr.rel (%p208) target = $region24
        $region23: #{tpu_custom_call.1} parent=15 // pred_region
          %p211 = scmp.lt.s32.totalorder %s22, 1
          %s212 = scalar_select %p211, %s22, 1
          %s213 = smul.addr %s212, 8
          %s214 = scalar_lea.vmem %s1, %s213
        $region24: #{tpu_custom_call.1} parent=15 // pred_fallthru
          _
        // Predicated region
        $region25: #{tpu_custom_call.1} parent=15 // pred_check
          %p215 = pneg %p98
        $region26: #{tpu_custom_call.1} parent=15 // pred_check_branch
          %217 = sbr.rel (%p215) target = $region28
        $region27: #{tpu_custom_call.1} parent=15 // pred_region
          %s218 = smul.u32 16, %s21
          %p219 = scmp.lt.s32.totalorder %s218, 31
          %s220 = scalar_select %p219, %s218, 31
          %s221 = smul.addr %s220, 8
          %s222 = scalar_lea.vmem %s2, %s221
          %s223 = smul.u32 16, %s21
        $region28: #{tpu_custom_call.1} parent=15 // pred_fallthru
          _
        // Predicated region
        $region29: #{tpu_custom_call.1} parent=15 // pred_check
          %p224 = pneg %p124
        $region30: #{tpu_custom_call.1} parent=15 // pred_check_branch
          %226 = sbr.rel (%p224) target = $region32
        $region31: #{tpu_custom_call.1} parent=15 // pred_region
          %p227 = scmp.lt.s32.totalorder %s22, 1
          %s228 = scalar_select %p227, %s22, 1
          %s229 = scalar_lea.vmem %s3, %s228
        $region32: #{tpu_custom_call.1} parent=15 // pred_fallthru
          _
        // Predicated region
        $region33: #{tpu_custom_call.1} parent=15 // pred_check
          %p230 = pneg %p150
        $region34: #{tpu_custom_call.1} parent=15 // pred_check_branch
          %232 = sbr.rel (%p230) target = $region36
        $region35: #{tpu_custom_call.1} parent=15 // pred_region
          %p233 = scmp.lt.s32.totalorder %s22, 1
          %s234 = scalar_select %p233, %s22, 1
          %s235 = scalar_lea.vmem %s4, %s234
        $region36: #{tpu_custom_call.1} parent=15 // pred_fallthru
          _
      $region16: #{tpu_custom_call.1} parent=5 // pred_fallthru
        _
      %p236 = scmp.le.s32.totalorder 1, %s14
      %p237 = scmp.lt.s32.totalorder %s14, 5
      %p238 = pnand %p236, %p237
      %p239 = pneg %p238
      // Predicated region
      $region37: #{tpu_custom_call.1} parent=5 // pred_check
        _
      $region38: #{tpu_custom_call.1} parent=5 // pred_check_branch
        %241 = sbr.rel (%p238) target = $region40
      $region39: #{tpu_custom_call.1} parent=5 // pred_region
        %s242 = ssub.s32 %s14, 1
        %p243 = scmp.lt.s32.totalorder %s23, 1
        %s244 = scalar_select %p243, %s23, 1
        %s245 = smul.addr %s244, 8
        %s246 = scalar_lea.vmem %s0, %s245
        %p247 = pneg %p52
        %p248 = pneg %p49
        %p249 = scmp.lt.s32.totalorder %s24, 1
        %s250 = scalar_select %p249, %s24, 1
        %s251 = smul.addr %s250, 8
        %s252 = scalar_lea.vmem %s1, %s251
        %p253 = pneg %p78
        %p254 = pneg %p75
        %s255 = smul.u32 16, %s23
        %p256 = scmp.lt.s32.totalorder %s255, 31
        %s257 = scalar_select %p256, %s255, 31
        %s258 = smul.addr %s257, 8
        %s259 = scalar_lea.vmem %s2, %s258
        %p260 = pneg %p104
        %p261 = pneg %p101
        %p262 = scmp.lt.s32.totalorder %s24, 1
        %s263 = scalar_select %p262, %s24, 1
        %s264 = scalar_lea.vmem %s3, %s263
        %p265 = pneg %p130
        %p266 = pneg %p127
        %p267 = scmp.lt.s32.totalorder %s24, 1
        %s268 = scalar_select %p267, %s24, 1
        %s269 = scalar_lea.vmem %s4, %s268
        %p270 = pneg %p156
        %p271 = pneg %p153
        %p272 = pneg %p182
        %p273 = pneg %p179
        %s274 = sand.u32 %s169, 1
        %s275 = scalar_lea.sflag [#allocation7], %s274
        %s276 = sand.u32 %s169, 1
        %s277 = smul.addr %s276, 8
        %s278 = scalar_lea.vmem [#allocation6], %s277
        %p279 = scmp.lt.s32.totalorder %s23, 1
        %s280 = scalar_select %p279, %s23, 1
        %s281 = smul.addr %s280, 8
        %s282 = scalar_lea.vmem %s0, %s281
        %p283 = scmp.lt.s32.totalorder %s24, 1
        %s284 = scalar_select %p283, %s24, 1
        %s285 = smul.addr %s284, 8
        %s286 = scalar_lea.vmem %s1, %s285
        %s287 = smul.u32 16, %s23
        %p288 = scmp.lt.s32.totalorder %s287, 31
        %s289 = scalar_select %p288, %s287, 31
        %s290 = smul.addr %s289, 8
        %s291 = scalar_lea.vmem %s2, %s290
        %s292 = smul.u32 16, %s23
        %p293 = scmp.lt.s32.totalorder %s24, 1
        %s294 = scalar_select %p293, %s24, 1
        %s295 = scalar_lea.vmem %s3, %s294
        %p296 = scmp.lt.s32.totalorder %s24, 1
        %s297 = scalar_select %p296, %s24, 1
        %s298 = scalar_lea.vmem %s4, %s297
        %p299 = scmp.eq.s32.totalorder %s24, 0
        // Predicated region
        $region41: #{tpu_custom_call.1} parent=39 // pred_check
          %p300 = pneg %p299
        $region42: #{tpu_custom_call.1} parent=39 // pred_check_branch
          %302 = sbr.rel (%p300) target = $region44
        $region43: #{tpu_custom_call.1} parent=39 // pred_region
          %vm303 = vcmask 7168
          %304 = vst.msk [vmem:[#allocation2] sm:$0xff] %vm303, 0.0
          %305 = vst.msk [vmem:[#allocation3] sm:$0xff] %vm303, 0.0
          %306 = vst.msk [vmem:[#allocation4] sm:$0xff] %vm303, 0.0
          %vm307 = vcmask 0
          %308 = vst.msk [vmem:[#allocation5] sm:$0x1] %vm307, 0.0
        $region44: #{tpu_custom_call.1} parent=39 // pred_fallthru
          _
        %v309 = vld [vmem:[%s282] sm:$0xff]
        %v310 = vld [vmem:[%s286] sm:$0xff]
        %v311 = vld [vmem:[%s291] sm:$0xff]
        %v312 = vld [vmem:[%s291 + $0x8] sm:$0xff]
        %v313 = vld [vmem:[%s291 + $0x10] sm:$0xff]
        %v314 = vld [vmem:[%s291 + $0x18] sm:$0xff]
        %v315 = vld [vmem:[%s291 + $0x20] sm:$0xff]
        %v316 = vld [vmem:[%s291 + $0x28] sm:$0xff]
        %v317 = vld [vmem:[%s291 + $0x30] sm:$0xff]
        %v318 = vld [vmem:[%s291 + $0x38] sm:$0xff]
        %v319 = vld [vmem:[%s291 + $0x40] sm:$0xff]
        %v320 = vld [vmem:[%s291 + $0x48] sm:$0xff]
        %v321 = vld [vmem:[%s291 + $0x50] sm:$0xff]
        %v322 = vld [vmem:[%s291 + $0x58] sm:$0xff]
        %v323 = vld [vmem:[%s291 + $0x60] sm:$0xff]
        %v324 = vld [vmem:[%s291 + $0x68] sm:$0xff]
        %v325 = vld [vmem:[%s291 + $0x70] sm:$0xff]
        %v326 = vld [vmem:[%s291 + $0x78] sm:$0xff]
        %v327 = vld [vmem:[%s295] sm:$0x1]
        %329 = vset.pattern.permute.xlu0 0
        %330 = vperm.xlu0 %329, %v311
        %v331 = vpop.permute.xlu0 %330
        %334 = vset.pattern.permute.xlu0 0
        %335 = vperm.xlu0 %334, %v312
        %v336 = vpop.permute.xlu0 %335
        %339 = vset.pattern.permute.xlu0 0
        %340 = vperm.xlu0 %339, %v313
        %v341 = vpop.permute.xlu0 %340
        %344 = vset.pattern.permute.xlu0 0
        %345 = vperm.xlu0 %344, %v314
        %v346 = vpop.permute.xlu0 %345
        %349 = vset.pattern.permute.xlu0 0
        %350 = vperm.xlu0 %349, %v315
        %v351 = vpop.permute.xlu0 %350
        %354 = vset.pattern.permute.xlu0 0
        %355 = vperm.xlu0 %354, %v316
        %v356 = vpop.permute.xlu0 %355
        %359 = vset.pattern.permute.xlu0 0
        %360 = vperm.xlu0 %359, %v317
        %v361 = vpop.permute.xlu0 %360
        %364 = vset.pattern.permute.xlu0 0
        %365 = vperm.xlu0 %364, %v318
        %v366 = vpop.permute.xlu0 %365
        %369 = vset.pattern.permute.xlu0 0
        %370 = vperm.xlu0 %369, %v319
        %v371 = vpop.permute.xlu0 %370
        %374 = vset.pattern.permute.xlu0 0
        %375 = vperm.xlu0 %374, %v320
        %v376 = vpop.permute.xlu0 %375
        %379 = vset.pattern.permute.xlu0 0
        %380 = vperm.xlu0 %379, %v321
        %v381 = vpop.permute.xlu0 %380
        %384 = vset.pattern.permute.xlu0 0
        %385 = vperm.xlu0 %384, %v322
        %v386 = vpop.permute.xlu0 %385
        %389 = vset.pattern.permute.xlu0 0
        %390 = vperm.xlu0 %389, %v323
        %v391 = vpop.permute.xlu0 %390
        %394 = vset.pattern.permute.xlu0 0
        %395 = vperm.xlu0 %394, %v324
        %v396 = vpop.permute.xlu0 %395
        %399 = vset.pattern.permute.xlu0 0
        %400 = vperm.xlu0 %399, %v325
        %v401 = vpop.permute.xlu0 %400
        %404 = vset.pattern.permute.xlu0 0
        %405 = vperm.xlu0 %404, %v326
        %v406 = vpop.permute.xlu0 %405
        %v409 = vperm.slane %v327, 0
        %v411 = vsub.f32 %v331, %v409
        %v412 = vsub.f32 %v336, %v409
        %v413 = vsub.f32 %v341, %v409
        %v414 = vsub.f32 %v346, %v409
        %v415 = vsub.f32 %v351, %v409
        %v416 = vsub.f32 %v356, %v409
        %v417 = vsub.f32 %v361, %v409
        %v418 = vsub.f32 %v366, %v409
        %v419 = vsub.f32 %v371, %v409
        %v420 = vsub.f32 %v376, %v409
        %v421 = vsub.f32 %v381, %v409
        %v422 = vsub.f32 %v386, %v409
        %v423 = vsub.f32 %v391, %v409
        %v424 = vsub.f32 %v396, %v409
        %v425 = vsub.f32 %v401, %v409
        %v426 = vsub.f32 %v406, %v409
        %v427 = vmul.f32 %v411, %v411
        %v428 = vmul.f32 %v412, %v412
        %v429 = vmul.f32 %v413, %v413
        %v430 = vmul.f32 %v414, %v414
        %v431 = vmul.f32 %v415, %v415
        %v432 = vmul.f32 %v416, %v416
        %v433 = vmul.f32 %v417, %v417
        %v434 = vmul.f32 %v418, %v418
        %v435 = vmul.f32 %v419, %v419
        %v436 = vmul.f32 %v420, %v420
        %v437 = vmul.f32 %v421, %v421
        %v438 = vmul.f32 %v422, %v422
        %v439 = vmul.f32 %v423, %v423
        %v440 = vmul.f32 %v424, %v424
        %v441 = vmul.f32 %v425, %v425
        %v442 = vmul.f32 %v426, %v426
        %v443 = vmul.f32 %v427, -0.5
        %v444 = vmul.f32 %v428, -0.5
        %v445 = vmul.f32 %v429, -0.5
        %v446 = vmul.f32 %v430, -0.5
        %v447 = vmul.f32 %v431, -0.5
        %v448 = vmul.f32 %v432, -0.5
        %v449 = vmul.f32 %v433, -0.5
        %v450 = vmul.f32 %v434, -0.5
        %v451 = vmul.f32 %v435, -0.5
        %v452 = vmul.f32 %v436, -0.5
        %v453 = vmul.f32 %v437, -0.5
        %v454 = vmul.f32 %v438, -0.5
        %v455 = vmul.f32 %v439, -0.5
        %v456 = vmul.f32 %v440, -0.5
        %v457 = vmul.f32 %v441, -0.5
        %v458 = vmul.f32 %v442, -0.5
        %v459 = vmul.f32 %v443, 1.442695
        %v460 = vpow.pop %v459
        %v461 = vmul.f32 %v444, 1.442695
        %v462 = vpow.pop %v461
        %v463 = vmul.f32 %v445, 1.442695
        %v464 = vpow.pop %v463
        %v465 = vmul.f32 %v446, 1.442695
        %v466 = vpow.pop %v465
        %v467 = vmul.f32 %v447, 1.442695
        %v468 = vpow.pop %v467
        %v469 = vmul.f32 %v448, 1.442695
        %v470 = vpow.pop %v469
        %v471 = vmul.f32 %v449, 1.442695
        %v472 = vpow.pop %v471
        %v473 = vmul.f32 %v450, 1.442695
        %v474 = vpow.pop %v473
        %v475 = vmul.f32 %v451, 1.442695
        %v476 = vpow.pop %v475
        %v477 = vmul.f32 %v452, 1.442695
        %v478 = vpow.pop %v477
        %v479 = vmul.f32 %v453, 1.442695
        %v480 = vpow.pop %v479
        %v481 = vmul.f32 %v454, 1.442695
        %v482 = vpow.pop %v481
        %v483 = vmul.f32 %v455, 1.442695
        %v484 = vpow.pop %v483
        %v485 = vmul.f32 %v456, 1.442695
        %v486 = vpow.pop %v485
        %v487 = vmul.f32 %v457, 1.442695
        %v488 = vpow.pop %v487
        %v489 = vmul.f32 %v458, 1.442695
        %v490 = vpow.pop %v489
        %491 = vmatpush.msra.mxu0 %v490
        %492 = vmatpush.msra.mxu0 %v488
        %493 = vmatpush.msra.mxu0 %v486
        %494 = vmatpush.msra.mxu0 %v484
        %495 = vmatpush.msra.mxu0 %v482
        %496 = vmatpush.msra.mxu0 %v480
        %497 = vmatpush.msra.mxu0 %v478
        %498 = vmatpush.msra.mxu0 %v476
        %499 = vmatpush.msra.mxu0 %v474
        %500 = vmatpush.msra.mxu0 %v472
        %501 = vmatpush.msra.mxu0 %v470
        %502 = vmatpush.msra.mxu0 %v468
        %503 = vmatpush.msra.mxu0 %v466
        %504 = vmatpush.msra.mxu0 %v464
        %505 = vmatpush.msra.mxu0 %v462
        %506 = vmatpush.msra.mxu0 %v460
        %507 = vmatmul.f32.gmra.mxu0 %v309
        %v508 = vpop.f32.mrf.mxu0
        %v509 = vadd.f32 0.0, %v508
        %510 = vdwg.mxu0
        %v511 = vld [vmem:[#allocation2] sm:$0xff]
        %v512 = vmul.f32 %v509, %v310
        %513 = vadd.xlane.f32.xlu0 %v512
        %v514 = vpop.xlane.xlu0 %513
        %v515 = vadd.f32 %v511, %v514
        %vm516 = vcmask 7168
        %517 = vst.msk [vmem:[#allocation2] sm:$0xff] %vm516, %v515
        %p518 = scmp.eq.s32.totalorder %s23, 0
        // Predicated region
        $region45: #{tpu_custom_call.1} parent=39 // pred_check
          %p519 = pneg %p518
        $region46: #{tpu_custom_call.1} parent=39 // pred_check_branch
          %521 = sbr.rel (%p519) target = $region48
        $region47: #{tpu_custom_call.1} parent=39 // pred_region
          %v522 = vld [vmem:[%s295] sm:$0x1]
          %v523 = vld [vmem:[%s298] sm:$0x1]
          %v524 = vld [vmem:[#allocation3] sm:$0xff]
          %525 = vadd.xlane.f32.xlu0 %v310
          %v526 = vpop.xlane.xlu0 %525
          %v527 = vadd.f32 %v524, %v526
          %528 = vst.msk [vmem:[#allocation3] sm:$0xff] %vm516, %v527
          %v529 = vld [vmem:[#allocation4] sm:$0xff]
          %v531 = vperm.slane %v522, 0
          %v533 = vmul.f32 %v310, %v531
          %534 = vadd.xlane.f32.xlu0 %v533
          %v535 = vpop.xlane.xlu0 %534
          %v536 = vadd.f32 %v529, %v535
          %537 = vst.msk [vmem:[#allocation4] sm:$0xff] %vm516, %v536
          %v538 = vsub.f32 %v522, %v523
          %v539 = vld [vmem:[#allocation5] sm:$0x1]
          %v540 = vmul.f32 %v538, %v538
          %vm541 = vcmask 1040384
          %v542 = vsel %vm541, %v540, 0.0
          %543 = vadd.xlane.f32.xlu0 %v542
          %v544 = vpop.xlane.xlu0 %543
          %v545 = vadd.f32 %v539, %v544
          %vm546 = vcmask 0
          %547 = vst.msk [vmem:[#allocation5] sm:$0x1] %vm546, %v545
        $region48: #{tpu_custom_call.1} parent=39 // pred_fallthru
          _
        %p548 = scmp.eq.s32.totalorder %s24, 1
        // Predicated region
        $region49: #{tpu_custom_call.1} parent=39 // pred_check
          %p549 = pneg %p548
        $region50: #{tpu_custom_call.1} parent=39 // pred_check_branch
          %551 = sbr.rel (%p549) target = $region52
        $region51: #{tpu_custom_call.1} parent=39 // pred_region
          %v552 = vlaneseq
          %v553 = vand.u32 %v552, 127
          %v554 = vlaneseq
          %v555 = vshrl.u32 %v554, 7
          %vm556 = vcmp.eq.s32.totalorder %v553, 0
          %v557 = vld [vmem:[#allocation2] sm:$0x1]
          %559 = vset.pattern.permute.xlu0 0
          %560 = vperm.xlu0 %559, %v557
          %v561 = vpop.permute.xlu0 %560
          %v563 = vsel %vm556, %v561, 0.0
          %vm564 = vcmp.eq.s32.totalorder %v553, 1
          %v565 = vld [vmem:[#allocation2 + $0x1] sm:$0x1]
          %567 = vset.pattern.permute.xlu0 0
          %568 = vperm.xlu0 %567, %v565
          %v569 = vpop.permute.xlu0 %568
          %v571 = vsel %vm564, %v569, 0.0
          %v572 = vadd.f32 %v563, %v571
          %vm573 = vcmp.eq.s32.totalorder %v553, 2
          %v574 = vld [vmem:[#allocation2 + $0x2] sm:$0x1]
          %576 = vset.pattern.permute.xlu0 0
          %577 = vperm.xlu0 %576, %v574
          %v578 = vpop.permute.xlu0 %577
          %v580 = vsel %vm573, %v578, 0.0
          %v581 = vadd.f32 %v572, %v580
          %vm582 = vcmp.eq.s32.totalorder %v553, 3
          %v583 = vld [vmem:[#allocation5] sm:$0x1]
          %585 = vset.pattern.permute.xlu0 0
          %586 = vperm.xlu0 %585, %v583
          %v587 = vpop.permute.xlu0 %586
          %v589 = vperm.slane %v587, 0
          %v590 = vsel %vm582, %v589, 0.0
          %v591 = vadd.f32 %v581, %v590
          %vm592 = vcmp.eq.s32.totalorder %v553, 4
          %v593 = vld [vmem:[#allocation3] sm:$0x1]
          %595 = vset.pattern.permute.xlu0 0
          %596 = vperm.xlu0 %595, %v593
          %v597 = vpop.permute.xlu0 %596
          %v599 = vsel %vm592, %v597, 0.0
          %v600 = vadd.f32 %v591, %v599
          %vm601 = vcmp.eq.s32.totalorder %v553, 5
          %v602 = vld [vmem:[#allocation3 + $0x1] sm:$0x1]
          %604 = vset.pattern.permute.xlu0 0
          %605 = vperm.xlu0 %604, %v602
          %v606 = vpop.permute.xlu0 %605
          %v608 = vsel %vm601, %v606, 0.0
          %v609 = vadd.f32 %v600, %v608
          %vm610 = vcmp.eq.s32.totalorder %v553, 6
          %v611 = vld [vmem:[#allocation4] sm:$0x1]
          %613 = vset.pattern.permute.xlu0 0
          %614 = vperm.xlu0 %613, %v611
          %v615 = vpop.permute.xlu0 %614
          %v617 = vsel %vm610, %v615, 0.0
          %v618 = vadd.f32 %v609, %v617
          %vm619 = vcmp.eq.s32.totalorder %v553, 7
          %v620 = vld [vmem:[#allocation4 + $0x1] sm:$0x1]
          %622 = vset.pattern.permute.xlu0 0
          %623 = vperm.xlu0 %622, %v620
          %v624 = vpop.permute.xlu0 %623
          %v626 = vsel %vm619, %v624, 0.0
          %v627 = vadd.f32 %v618, %v626
          %vm628 = vcmp.eq.s32.totalorder %v555, 0
          %v629 = vperm.slane %v627, 0
          %v630 = vsel %vm628, %v629, 0.0
          %631 = vst [vmem:[%s278] sm:$0xff] %v630
        $region52: #{tpu_custom_call.1} parent=39 // pred_fallthru
          _
        %s632 = sand.u32 %s169, 1
        %s633 = scalar_lea.sflag [#allocation7], %s632
        %s634 = sand.u32 %s169, 1
        %s635 = smul.addr %s634, 8
        %s636 = scalar_lea.vmem [#allocation6], %s635
        // Predicated region
        $region53: #{tpu_custom_call.1} parent=39 // pred_check
          %p637 = pneg %p179
        $region54: #{tpu_custom_call.1} parent=39 // pred_check_branch
          %639 = sbr.rel (%p637) target = $region56
        $region55: #{tpu_custom_call.1} parent=39 // pred_region
          %641 = vsyncadd %s633, 0
          %s642 = smul.addr %s23, 8
          %s643 = scalar_lea.hbm %s5, %s642
          %s645 = sshll.u32 %s636, 4
          %s646 = int_to_ptr.vmem [resolvable:$true] %s645
          %s647 = sshll.u32 %s643, 4
          %s648 = int_to_ptr.hbm [resolvable:$true] %s647
          %650 = dma.vmem_to_hbm [thread:$0]  %s646, 128, %s648, %s633
        $region56: #{tpu_custom_call.1} parent=39 // pred_fallthru
          _
      $region40: #{tpu_custom_call.1} parent=5 // pred_fallthru
        _
      %p651 = scmp.le.s32.totalorder 2, %s14
      // Predicated region
      $region57: #{tpu_custom_call.1} parent=5 // pred_check
        %p652 = pneg %p651
      $region58: #{tpu_custom_call.1} parent=5 // pred_check_branch
        %654 = sbr.rel (%p652) target = $region60
      $region59: #{tpu_custom_call.1} parent=5 // pred_region
        %s655 = ssub.s32 %s14, 2
        // Predicated region
        $region61: #{tpu_custom_call.1} parent=59 // pred_check
          %p656 = pneg %p185
        $region62: #{tpu_custom_call.1} parent=59 // pred_check_branch
          %658 = sbr.rel (%p656) target = $region64
        $region63: #{tpu_custom_call.1} parent=59 // pred_region
          %s659 = sand.u32 %s170, 1
          %s660 = scalar_lea.sflag [#allocation7], %s659
          %s661 = sand.u32 %s170, 1
          %s662 = smul.addr %s661, 8
          %s663 = scalar_lea.vmem [#allocation6], %s662
          %665 = dma.done %s660, 128
        $region64: #{tpu_custom_call.1} parent=59 // pred_fallthru
          _
      $region60: #{tpu_custom_call.1} parent=5 // pred_fallthru
        _
    $region6: #{tpu_custom_call.1} parent=1 // loop_footer
      %s18 = sadd.s32 1, %s14
    $region7: #{tpu_custom_call.1} parent=1 // loop_footer_branch
      %13 = sbr.rel target = $region3
    $region8: #{tpu_custom_call.1} parent=1 // loop_exit
      _
    %666 = vsyncpa [#allocation7], 1
    %s667 = scalar_lea.sflag [#allocation7], 1
    %668 = vsyncpa %s667, 1

</llo_original>
